<compile_context>
chip_gen: v6e
topology: v6e:2x2x1
jax: 0.10.0
libtpu: 0.0.40
codegen_flags: <defaults>
</compile_context>

<pallas_src>
import math

import jax
import jax.numpy as jnp
from jax.experimental import pallas as pl
from jax.experimental.pallas import tpu as pltpu


def _round_up(v, m):
    return ((v + m - 1) // m) * m


def _elementwise_dtype():
    """bf16 elementwise on v6e/v7x (bf16 VALU); f32 on v5e (no bf16 VPU/EUP)."""
    try:
        kind = jax.devices()[0].device_kind.lower()
    except Exception:
        kind = ""
    if "v5 lite" in kind or "v5e" in kind or "v5litepod" in kind:
        return jnp.float32
    return jnp.bfloat16


def _vmem_capacity_bytes():
    try:
        return int(pltpu.get_tpu_info().vmem_capacity_bytes)
    except Exception:
        return 64 << 20  # conservative fallback (v7x per-TensorCore)


def _vmem_estimate(ty, tx, Hp, n_hidden, ew_bytes):
    """Rough per-step VMEM peak.

    Counts ~3 live elementwise copies of the [TY*TX, Hp] activation block in
    the elementwise dtype plus one f32 matmul-output copy, the double-buffered
    streamed X1/Y1 tiles, the (still double-buffered) constant weight/bias
    blocks, the output block and the online-softmax scratch.
    """
    act = ty * tx * Hp * (3 * ew_bytes + 4)
    streams = 2 * Hp * (ty + tx) * ew_bytes
    consts = 2 * (n_hidden * (Hp * Hp * 2 + Hp * 4) + Hp * 4 + 4)
    out_blk = 2 * 8 * 128 * 4
    scratch = (2 * ty + 8) * 128 * 4
    return act + streams + consts + out_blk + scratch


def _pick_tile(N, Hp, n_hidden, ew_bytes, budget, cap=512):
    """Largest tile T (divides N, multiple of 8, <= cap) whose estimate fits."""
    cands = [t for t in range(min(N, cap), 7, -8) if N % t == 0 and t % 8 == 0]
    if not cands:
        return N
    for t in cands:
        if _vmem_estimate(t, t, Hp, n_hidden, ew_bytes) <= budget:
            return t
    return cands[-1]  # best effort: smallest tile


def _make_kernel(n_hidden, activation, TY, TX, Hp, ew_dtype):
    if activation == "tanh":
        # TODO(synk): with tanh the single EUP becomes the binding slot for
        # large TY*TX*Hp; a VPU polynomial tanh would be needed to go faster.
        act = jnp.tanh
    else:
        act = lambda v: jnp.maximum(v, 0.0)

    def kernel(*refs):
        y1_ref, x1_ref = refs[0], refs[1]
        idx = 2
        hidden = []
        for _ in range(n_hidden):
            hidden.append((refs[idx], refs[idx + 1]))
            idx += 2
        wo_ref, bo_ref = refs[idx], refs[idx + 1]
        out_ref = refs[idx + 2]
        m_scr, l_scr, t0_scr = refs[idx + 3], refs[idx + 4], refs[idx + 5]

        i = pl.program_id(0)          # y-row block  (parallel, state-free)
        k = pl.program_id(1)          # x-row block  (online-softmax reduction)
        nk = pl.num_programs(1)

        @pl.when(k == 0)
        def _():
            m_scr[...] = jnp.full(m_scr.shape, -jnp.inf, m_scr.dtype)
            l_scr[...] = jnp.zeros(l_scr.shape, l_scr.dtype)
            t0_scr[...] = jnp.zeros(t0_scr.shape, t0_scr.dtype)

        # First layer: bias already folded into X1 in the wrapper.  Pure VPU
        # broadcast-add + activation in the elementwise dtype (bf16 on v6e/v7x).
        h = act(y1_ref[...][:, None, :] + x1_ref[...][None, :, :])   # [TY,TX,Hp]
        h = h.reshape(TY * TX, Hp).astype(ew_dtype)

        # Hidden stack: bf16 x bf16 MXU matmul (f32 accumulate) with the bias
        # add + activation fused into one elementwise pass, carried in ew dtype.
        for (w_ref, b_ref) in hidden:
            h = act(jnp.dot(h.astype(jnp.bfloat16), w_ref[...],
                            preferred_element_type=jnp.float32)
                    + b_ref[...]).astype(ew_dtype)

        # Output layer (H -> 1) as a lane reduce on the flat [TY*TX, Hp]
        # layout; only the tiny [TY*TX, 1] score vector gets reshaped.
        s = jnp.sum(h * wo_ref[...], axis=-1, keepdims=True)         # [TY*TX,1]
        s = s.reshape(TY, TX) + bo_ref[...]                          # [TY, TX]

        # Diagonal (matched-pair / T0) contributions of this block.
        row_g = i * TY + jax.lax.broadcasted_iota(jnp.int32, (TY, TX), 0)
        col_g = k * TX + jax.lax.broadcasted_iota(jnp.int32, (TY, TX), 1)
        t0_scr[...] = t0_scr[...] + jnp.sum(jnp.where(row_g == col_g, s, 0.0))

        # Online softmax (per y row) across the x-row blocks.
        m_prev = m_scr[...]                                          # [TY, 1]
        m_new = jnp.maximum(m_prev, jnp.max(s, axis=1, keepdims=True))
        l_scr[...] = (jnp.exp(m_prev - m_new) * l_scr[...]
                      + jnp.sum(jnp.exp(s - m_new), axis=1, keepdims=True))
        m_scr[...] = m_new

        # Final x block: emit this y block's partial sums as a lane-dense row
        # (lane 0 = diagonal/T0 partial, lane 1 = sum of per-row logsumexp).
        @pl.when(k == nk - 1)
        def _():
            lse_sum = jnp.sum(m_scr[...] + jnp.log(l_scr[...]))
            sub = jax.lax.broadcasted_iota(jnp.int32, (8, 128), 0)
            lane = jax.lax.broadcasted_iota(jnp.int32, (8, 128), 1)
            out_ref[...] = jnp.where(
                (sub == 0) & (lane == 0), t0_scr[0, 0],
                jnp.where((sub == 0) & (lane == 1), lse_sum, 0.0))

    return kernel


def infonce_critic_forward(x, y, params, activation="relu", block_rows=None):
    """Pallas implementation of InfoNCECritic.forward.  Returns a scalar loss."""
    N, A = x.shape
    Ny, B = y.shape
    assert N == Ny
    assert N % 8 == 0, "this kernel requires the batch size to be a multiple of 8"

    (w1, b1), hidden, (wo, bo) = params
    H = w1.shape[1]
    Hp = _round_up(H, 128)             # lane-dense hidden dim (zero padded)
    n_hidden = len(hidden)

    f32, bf16 = jnp.float32, jnp.bfloat16
    ew_dtype = _elementwise_dtype()
    ew_bytes = 2 if ew_dtype == bf16 else 4

    # ---- hoisted first layer (tiny, done once, f32 for accuracy) ----
    X1 = x.astype(f32) @ w1[:A].astype(f32) + b1.astype(f32)        # [N, H]
    Y1 = y.astype(f32) @ w1[A:].astype(f32)                         # [N, H]

    def pad_cols(a, cols):
        return jnp.pad(a, ((0, 0), (0, cols - a.shape[1])))

    def pad2(a, rows, cols):
        return jnp.pad(a, ((0, rows - a.shape[0]), (0, cols - a.shape[1])))

    X1p = pad_cols(X1, Hp).astype(ew_dtype)
    Y1p = pad_cols(Y1, Hp).astype(ew_dtype)
    hidden_p = [(pad2(w, Hp, Hp).astype(bf16),
                 pad2(b.reshape(1, H), 1, Hp).astype(f32)) for (w, b) in hidden]
    wo_row = pad2(wo.reshape(H, 1).T, 1, Hp).astype(f32)
    bo_p = bo.reshape(1, 1).astype(f32)

    # ---- tile selection with real VMEM accounting + explicit vmem limit ----
    vmem_cap = _vmem_capacity_bytes()
    budget = int(vmem_cap * 0.75)
    if block_rows is None:
        T = _pick_tile(N, Hp, n_hidden, ew_bytes, budget)
    else:
        T = block_rows
    assert N % T == 0 and T % 8 == 0
    TY = TX = T
    grid = (N // TY, N // TX)
    est = _vmem_estimate(TY, TX, Hp, n_hidden, ew_bytes)
    vmem_limit = int(min(vmem_cap, max(32 << 20, 2 * est + (8 << 20))))

    in_arrays = [Y1p, X1p]
    for (w, b) in hidden_p:
        in_arrays += [w, b]
    in_arrays += [wo_row, bo_p]

    # TODO(synk): on v7x, give the constant operands (weights/biases/wo_row)
    # pipeline_mode=pl.Buffered(1) to drop their second VMEM buffer.
    in_specs = [pl.BlockSpec((TY, Hp), lambda i, k: (i, 0)),   # Y1 stream
                pl.BlockSpec((TX, Hp), lambda i, k: (k, 0))]   # X1 stream
    for (w, b) in hidden_p:
        in_specs += [pl.BlockSpec(w.shape, lambda i, k: (0, 0)),
                     pl.BlockSpec(b.shape, lambda i, k: (0, 0))]
    in_specs += [pl.BlockSpec(wo_row.shape, lambda i, k: (0, 0)),
                 pl.BlockSpec(bo_p.shape, lambda i, k: (0, 0))]

    n_yb = N // TY
    out = pl.pallas_call(
        _make_kernel(n_hidden, activation, TY, TX, Hp, ew_dtype),
        out_shape=jax.ShapeDtypeStruct((8 * n_yb, 128), f32),
        grid_spec=pltpu.PrefetchScalarGridSpec(
            num_scalar_prefetch=0,
            grid=grid,
            in_specs=in_specs,
            out_specs=pl.BlockSpec((8, 128), lambda i, k: (i, 0)),
            scratch_shapes=[pltpu.VMEM((TY, 1), f32),   # running row max
                            pltpu.VMEM((TY, 1), f32),   # running sum(exp)
                            pltpu.VMEM((1, 1), f32)],   # diagonal (T0) partial
        ),
        compiler_params=pltpu.CompilerParams(
            dimension_semantics=("parallel", "arbitrary"),
            vmem_limit_bytes=vmem_limit),
    )(*in_arrays)

    # Tiny final reduce in the wrapper (keeps the y-row grid axis state-free so
    # it can be split across v7x's two TensorCores, and avoids accumulating all
    # N logsumexp values into a single in-kernel scalar).
    t0_sum = jnp.sum(out[:, 0])
    lse_sum = jnp.sum(out[:, 1])
    lower = t0_sum / N - (lse_sum / N - math.log(N))
    return -lower


def init_mlp_params(key, dim, hidden_dim, output_dim, layers):
    """Deterministic init matching the shapes of mlp(dim, hidden, 1, layers, act)."""
    keys = jax.random.split(key, 2 * (layers + 2))

    def linear(kw, kb, fan_in, fan_out):
        bound = 1.0 / math.sqrt(fan_in)
        w = jax.random.uniform(kw, (fan_in, fan_out), jnp.float32, -bound, bound)
        b = jax.random.uniform(kb, (fan_out,), jnp.float32, -bound, bound)
        return w, b

    first = linear(keys[0], keys[1], dim, hidden_dim)
    hidden = [linear(keys[2 + 2 * l], keys[3 + 2 * l], hidden_dim, hidden_dim)
              for l in range(layers)]
    last = linear(keys[2 + 2 * layers], keys[3 + 2 * layers], hidden_dim, output_dim)
    return first, hidden, last


def infonce_reference(x, y, params, activation="relu"):
    """Plain-JAX replica of the PyTorch forward for correctness checking."""
    act = jnp.tanh if activation == "tanh" else jax.nn.relu
    (w1, b1), hidden, (wo, bo) = params

    def f(z):
        h = act(z @ w1 + b1)
        for (w, b) in hidden:
            h = act(h @ w + b)
        return h @ wo + bo

    N = y.shape[0]
    x_tile = jnp.broadcast_to(x[None, :, :], (N, N, x.shape[1]))
    y_tile = jnp.broadcast_to(y[:, None, :], (N, N, y.shape[1]))
    T0 = f(jnp.concatenate([x, y], axis=-1))                     # [N, 1]
    T1 = f(jnp.concatenate([x_tile, y_tile], axis=-1))           # [N, N, 1]
    lower_bound = (T0.mean()
                   - (jax.scipy.special.logsumexp(T1, axis=1).mean() - math.log(N)))
    return -lower_bound


if __name__ == "__main__":
    N, A_dim, B_dim, hidden_dim, layers = 8, 16, 16, 32, 2
    activation = "relu"

    key = jax.random.PRNGKey(0)
    k_x, k_y, k_p = jax.random.split(key, 3)
    x = jax.random.normal(k_x, (N, A_dim), jnp.float32)
    y = jax.random.normal(k_y, (N, B_dim), jnp.float32)
    params = init_mlp_params(k_p, A_dim + B_dim, hidden_dim, 1, layers)

    loss = infonce_critic_forward(x, y, params, activation)
    loss = jax.block_until_ready(loss)

    with jax.default_matmul_precision("highest"):
        ref = jax.block_until_ready(infonce_reference(x, y, params, activation))

    assert jnp.isfinite(loss), loss
    # bf16 matmul operands / intermediates in the kernel vs. f32 reference.
    assert jnp.allclose(loss, ref, rtol=3e-2, atol=3e-2), (loss, ref)
    print("KERNEL_OK")
</pallas_src>

<mosaic_0001>
module attributes {stable_mosaic.version = 11 : i64} {
  func.func @kernel(%arg0: i32, %arg1: i32, %arg2: memref<8x128xbf16, #tpu.memory_space<vmem>>, %arg3: memref<8x128xbf16, #tpu.memory_space<vmem>>, %arg4: memref<128x128xbf16, #tpu.memory_space<vmem>>, %arg5: memref<1x128xf32, #tpu.memory_space<vmem>>, %arg6: memref<128x128xbf16, #tpu.memory_space<vmem>>, %arg7: memref<1x128xf32, #tpu.memory_space<vmem>>, %arg8: memref<1x128xf32, #tpu.memory_space<vmem>>, %arg9: memref<1x1xf32, #tpu.memory_space<vmem>>, %arg10: memref<8x128xf32, #tpu.memory_space<vmem>>, %arg11: memref<8x1xf32, #tpu.memory_space<vmem>>, %arg12: memref<8x1xf32, #tpu.memory_space<vmem>>, %arg13: memref<1x1xf32, #tpu.memory_space<vmem>>) attributes {dimension_semantics = [#tpu.dimension_semantics<parallel>, #tpu.dimension_semantics<arbitrary>], iteration_bounds = array<i64: 1, 1>, scalar_prefetch = 0 : i64, scratch_operands = 3 : i64, tpu.core_type = #tpu.core_type<tc>, window_params = [{transform_indices = @transform_0, window_bounds = array<i64: 8, 128>}, {transform_indices = @transform_1, window_bounds = array<i64: 8, 128>}, {pipeline_mode = #tpu.pipeline_mode<synchronous>, transform_indices = @transform_2, window_bounds = array<i64: 128, 128>}, {pipeline_mode = #tpu.pipeline_mode<synchronous>, transform_indices = @transform_3, window_bounds = array<i64: 1, 128>}, {pipeline_mode = #tpu.pipeline_mode<synchronous>, transform_indices = @transform_4, window_bounds = array<i64: 128, 128>}, {pipeline_mode = #tpu.pipeline_mode<synchronous>, transform_indices = @transform_5, window_bounds = array<i64: 1, 128>}, {pipeline_mode = #tpu.pipeline_mode<synchronous>, transform_indices = @transform_6, window_bounds = array<i64: 1, 128>}, {pipeline_mode = #tpu.pipeline_mode<synchronous>, transform_indices = @transform_7, window_bounds = array<i64: 1, 1>}, {transform_indices = @transform_8, window_bounds = array<i64: 8, 128>}]} {
    %c0_i32 = arith.constant 0 : i32
    %0 = arith.cmpi eq, %arg1, %c0_i32 : i32
    %1 = arith.extui %0 : i1 to i32
    %c0_i32_0 = arith.constant 0 : i32
    %2 = arith.cmpi ne, %1, %c0_i32_0 : i32
    scf.if %2 {
      %cst_40 = arith.constant 0xFF800000 : f32
      %77 = vector.broadcast %cst_40 : f32 to vector<8x1xf32>
      %c0_41 = arith.constant 0 : index
      %c0_42 = arith.constant 0 : index
      %78 = vector.load %arg11[%c0_41, %c0_42] : memref<8x1xf32, #tpu.memory_space<vmem>>, vector<8x1xf32>
      tpu.vector_store %arg11[%c0_41, %c0_42], %77 {strides = array<i32>} : memref<8x1xf32, #tpu.memory_space<vmem>>, vector<8x1xf32>,
      %cst_43 = arith.constant 0.000000e+00 : f32
      %79 = vector.broadcast %cst_43 : f32 to vector<8x1xf32>
      %c0_44 = arith.constant 0 : index
      %c0_45 = arith.constant 0 : index
      %80 = vector.load %arg12[%c0_44, %c0_45] : memref<8x1xf32, #tpu.memory_space<vmem>>, vector<8x1xf32>
      tpu.vector_store %arg12[%c0_44, %c0_45], %79 {strides = array<i32>} : memref<8x1xf32, #tpu.memory_space<vmem>>, vector<8x1xf32>,
      %cst_46 = arith.constant 0.000000e+00 : f32
      %81 = vector.broadcast %cst_46 : f32 to vector<1x1xf32>
      %c0_47 = arith.constant 0 : index
      %c0_48 = arith.constant 0 : index
      %82 = vector.load %arg13[%c0_47, %c0_48] : memref<1x1xf32, #tpu.memory_space<vmem>>, vector<1x1xf32>
      tpu.vector_store %arg13[%c0_47, %c0_48], %81 {strides = array<i32>} : memref<1x1xf32, #tpu.memory_space<vmem>>, vector<1x1xf32>,
    } else {
    }
    %c0 = arith.constant 0 : index
    %c0_1 = arith.constant 0 : index
    %3 = vector.load %arg2[%c0, %c0_1] : memref<8x128xbf16, #tpu.memory_space<vmem>>, vector<8x128xbf16>
    %4 = vector.shape_cast %3 : vector<8x128xbf16> to vector<8x1x128xbf16>
    %c0_2 = arith.constant 0 : index
    %c0_3 = arith.constant 0 : index
    %5 = vector.load %arg3[%c0_2, %c0_3] : memref<8x128xbf16, #tpu.memory_space<vmem>>, vector<8x128xbf16>
    %6 = vector.shape_cast %5 : vector<8x128xbf16> to vector<1x8x128xbf16>
    %7 = vector.broadcast %4 : vector<8x1x128xbf16> to vector<8x8x128xbf16>
    %8 = vector.broadcast %6 : vector<1x8x128xbf16> to vector<8x8x128xbf16>
    %9 = arith.addf %7, %8 : vector<8x8x128xbf16>
    %cst = arith.constant 0.000000e+00 : bf16
    %10 = vector.broadcast %cst : bf16 to vector<8x8x128xbf16>
    %11 = arith.maximumf %9, %10 : vector<8x8x128xbf16>
    %12 = vector.shape_cast %11 : vector<8x8x128xbf16> to vector<64x128xbf16>
    %c0_4 = arith.constant 0 : index
    %c0_5 = arith.constant 0 : index
    %13 = vector.load %arg4[%c0_4, %c0_5] : memref<128x128xbf16, #tpu.memory_space<vmem>>, vector<128x128xbf16>
    %cst_6 = arith.constant dense<0.000000e+00> : vector<64x128xf32>
    %14 = tpu.matmul %12, %13, %cst_6 {dimension_numbers = #tpu.dot_dimension_numbers<[1], [0], [0], [1], [0, 0, 1, 1], [], []>} : vector<64x128xbf16>, vector<128x128xbf16>, vector<64x128xf32> -> vector<64x128xf32>
    %c0_7 = arith.constant 0 : index
    %c0_8 = arith.constant 0 : index
    %15 = vector.load %arg5[%c0_7, %c0_8] : memref<1x128xf32, #tpu.memory_space<vmem>>, vector<1x128xf32>
    %16 = vector.broadcast %15 : vector<1x128xf32> to vector<64x128xf32>
    %17 = arith.addf %14, %16 : vector<64x128xf32>
    %cst_9 = arith.constant 0.000000e+00 : f32
    %18 = vector.broadcast %cst_9 : f32 to vector<64x128xf32>
    %19 = arith.maximumf %17, %18 : vector<64x128xf32>
    %20 = arith.truncf %19 : vector<64x128xf32> to vector<64x128xbf16>
    %c0_10 = arith.constant 0 : index
    %c0_11 = arith.constant 0 : index
    %21 = vector.load %arg6[%c0_10, %c0_11] : memref<128x128xbf16, #tpu.memory_space<vmem>>, vector<128x128xbf16>
    %cst_12 = arith.constant dense<0.000000e+00> : vector<64x128xf32>
    %22 = tpu.matmul %20, %21, %cst_12 {dimension_numbers = #tpu.dot_dimension_numbers<[1], [0], [0], [1], [0, 0, 1, 1], [], []>} : vector<64x128xbf16>, vector<128x128xbf16>, vector<64x128xf32> -> vector<64x128xf32>
    %c0_13 = arith.constant 0 : index
    %c0_14 = arith.constant 0 : index
    %23 = vector.load %arg7[%c0_13, %c0_14] : memref<1x128xf32, #tpu.memory_space<vmem>>, vector<1x128xf32>
    %24 = vector.broadcast %23 : vector<1x128xf32> to vector<64x128xf32>
    %25 = arith.addf %22, %24 : vector<64x128xf32>
    %cst_15 = arith.constant 0.000000e+00 : f32
    %26 = vector.broadcast %cst_15 : f32 to vector<64x128xf32>
    %27 = arith.maximumf %25, %26 : vector<64x128xf32>
    %28 = arith.truncf %27 : vector<64x128xf32> to vector<64x128xbf16>
    %c0_16 = arith.constant 0 : index
    %c0_17 = arith.constant 0 : index
    %29 = vector.load %arg8[%c0_16, %c0_17] : memref<1x128xf32, #tpu.memory_space<vmem>>, vector<1x128xf32>
    %30 = arith.extf %28 : vector<64x128xbf16> to vector<64x128xf32>
    %31 = vector.broadcast %29 : vector<1x128xf32> to vector<64x128xf32>
    %32 = arith.mulf %30, %31 : vector<64x128xf32>
    %cst_18 = arith.constant dense<0.000000e+00> : vector<64xf32>
    %33 = vector.multi_reduction <add>, %32, %cst_18 [1] : vector<64x128xf32> to vector<64xf32>
    %34 = vector.shape_cast %33 : vector<64xf32> to vector<64x1xf32>
    %35 = vector.shape_cast %34 : vector<64x1xf32> to vector<8x8xf32>
    %c0_19 = arith.constant 0 : index
    %c0_20 = arith.constant 0 : index
    %36 = vector.load %arg9[%c0_19, %c0_20] : memref<1x1xf32, #tpu.memory_space<vmem>>, vector<1x1xf32>
    %37 = vector.broadcast %36 : vector<1x1xf32> to vector<8x8xf32>
    %38 = arith.addf %35, %37 : vector<8x8xf32>
    %c8_i32 = arith.constant 8 : i32
    %39 = arith.muli %arg0, %c8_i32 : i32
    %40 = tpu.iota {dimensions = array<i32: 0>} : vector<8x8xi32>
    %41 = vector.broadcast %39 : i32 to vector<8x8xi32>
    %42 = arith.addi %41, %40 : vector<8x8xi32>
    %c8_i32_21 = arith.constant 8 : i32
    %43 = arith.muli %arg1, %c8_i32_21 : i32
    %44 = tpu.iota {dimensions = array<i32: 1>} : vector<8x8xi32>
    %45 = vector.broadcast %43 : i32 to vector<8x8xi32>
    %46 = arith.addi %45, %44 : vector<8x8xi32>
    %c0_22 = arith.constant 0 : index
    %c0_23 = arith.constant 0 : index
    %47 = vector.load %arg13[%c0_22, %c0_23] : memref<1x1xf32, #tpu.memory_space<vmem>>, vector<1x1xf32>
    %48 = arith.cmpi eq, %42, %46 : vector<8x8xi32>
    %cst_24 = arith.constant 0.000000e+00 : f32
    %49 = vector.broadcast %cst_24 : f32 to vector<8x8xf32>
    %50 = arith.select %48, %38, %49 : vector<8x8xi1>, vector<8x8xf32>
    %51 = vector.shape_cast %50 : vector<8x8xf32> to vector<1x8x8xf32>
    %cst_25 = arith.constant dense<0.000000e+00> : vector<1xf32>
    %52 = vector.multi_reduction <add>, %51, %cst_25 [1, 2] : vector<1x8x8xf32> to vector<1xf32>
    %53 = vector.shape_cast %52 : vector<1xf32> to vector<1x1x1xf32>
    %54 = vector.extract %53[0, 0, 0] : f32 from vector<1x1x1xf32>
    %55 = vector.broadcast %54 : f32 to vector<1x1xf32>
    %56 = arith.addf %47, %55 : vector<1x1xf32>
    %c0_26 = arith.constant 0 : index
    %c0_27 = arith.constant 0 : index
    %57 = vector.load %arg13[%c0_26, %c0_27] : memref<1x1xf32, #tpu.memory_space<vmem>>, vector<1x1xf32>
    tpu.vector_store %arg13[%c0_26, %c0_27], %56 {strides = array<i32>} : memref<1x1xf32, #tpu.memory_space<vmem>>, vector<1x1xf32>,
    %c0_28 = arith.constant 0 : index
    %c0_29 = arith.constant 0 : index
    %58 = vector.load %arg11[%c0_28, %c0_29] : memref<8x1xf32, #tpu.memory_space<vmem>>, vector<8x1xf32>
    %cst_30 = arith.constant dense<0xFF800000> : vector<8xf32>
    %59 = vector.multi_reduction <maximumf>, %38, %cst_30 [1] : vector<8x8xf32> to vector<8xf32>
    %60 = vector.shape_cast %59 : vector<8xf32> to vector<8x1xf32>
    %61 = arith.maximumf %58, %60 : vector<8x1xf32>
    %62 = arith.subf %58, %61 : vector<8x1xf32>
    %63 = math.exp %62 : vector<8x1xf32>
    %c0_31 = arith.constant 0 : index
    %c0_32 = arith.constant 0 : index
    %64 = vector.load %arg12[%c0_31, %c0_32] : memref<8x1xf32, #tpu.memory_space<vmem>>, vector<8x1xf32>
    %65 = arith.mulf %63, %64 : vector<8x1xf32>
    %66 = vector.broadcast %61 : vector<8x1xf32> to vector<8x8xf32>
    %67 = arith.subf %38, %66 : vector<8x8xf32>
    %68 = math.exp %67 : vector<8x8xf32>
    %cst_33 = arith.constant dense<0.000000e+00> : vector<8xf32>
    %69 = vector.multi_reduction <add>, %68, %cst_33 [1] : vector<8x8xf32> to vector<8xf32>
    %70 = vector.shape_cast %69 : vector<8xf32> to vector<8x1xf32>
    %71 = arith.addf %65, %70 : vector<8x1xf32>
    %c0_34 = arith.constant 0 : index
    %c0_35 = arith.constant 0 : index
    %72 = vector.load %arg12[%c0_34, %c0_35] : memref<8x1xf32, #tpu.memory_space<vmem>>, vector<8x1xf32>
    tpu.vector_store %arg12[%c0_34, %c0_35], %71 {strides = array<i32>} : memref<8x1xf32, #tpu.memory_space<vmem>>, vector<8x1xf32>,
    %c0_36 = arith.constant 0 : index
    %c0_37 = arith.constant 0 : index
    %73 = vector.load %arg11[%c0_36, %c0_37] : memref<8x1xf32, #tpu.memory_space<vmem>>, vector<8x1xf32>
    tpu.vector_store %arg11[%c0_36, %c0_37], %61 {strides = array<i32>} : memref<8x1xf32, #tpu.memory_space<vmem>>, vector<8x1xf32>,
    %c0_i32_38 = arith.constant 0 : i32
    %74 = arith.cmpi eq, %arg1, %c0_i32_38 : i32
    %75 = arith.extui %74 : i1 to i32
    %c0_i32_39 = arith.constant 0 : i32
    %76 = arith.cmpi ne, %75, %c0_i32_39 : i32
    scf.if %76 {
      %c0_40 = arith.constant 0 : index
      %c0_41 = arith.constant 0 : index
      %77 = vector.load %arg11[%c0_40, %c0_41] : memref<8x1xf32, #tpu.memory_space<vmem>>, vector<8x1xf32>
      %c0_42 = arith.constant 0 : index
      %c0_43 = arith.constant 0 : index
      %78 = vector.load %arg12[%c0_42, %c0_43] : memref<8x1xf32, #tpu.memory_space<vmem>>, vector<8x1xf32>
      %79 = math.log %78 : vector<8x1xf32>
      %80 = arith.addf %77, %79 : vector<8x1xf32>
      %81 = vector.shape_cast %80 : vector<8x1xf32> to vector<1x8x1xf32>
      %cst_44 = arith.constant dense<0.000000e+00> : vector<1xf32>
      %82 = vector.multi_reduction <add>, %81, %cst_44 [1, 2] : vector<1x8x1xf32> to vector<1xf32>
      %83 = vector.shape_cast %82 : vector<1xf32> to vector<1x1x1xf32>
      %84 = vector.extract %83[0, 0, 0] : f32 from vector<1x1x1xf32>
      %85 = tpu.iota {dimensions = array<i32: 0>} : vector<8x128xi32>
      %86 = tpu.iota {dimensions = array<i32: 1>} : vector<8x128xi32>
      %c0_i32_45 = arith.constant 0 : i32
      %87 = vector.broadcast %c0_i32_45 : i32 to vector<8x128xi32>
      %88 = arith.cmpi eq, %85, %87 : vector<8x128xi32>
      %c0_i32_46 = arith.constant 0 : i32
      %89 = vector.broadcast %c0_i32_46 : i32 to vector<8x128xi32>
      %90 = arith.cmpi eq, %86, %89 : vector<8x128xi32>
      %91 = arith.andi %88, %90 : vector<8x128xi1>
      %c0_47 = arith.constant 0 : index
      %c0_48 = arith.constant 0 : index
      %92 = vector.load %arg13[%c0_47, %c0_48] : memref<1x1xf32, #tpu.memory_space<vmem>>, vector<1x1xf32>
      %93 = vector.extract %92[0, 0] : f32 from vector<1x1xf32>
      %c0_i32_49 = arith.constant 0 : i32
      %94 = vector.broadcast %c0_i32_49 : i32 to vector<8x128xi32>
      %95 = arith.cmpi eq, %85, %94 : vector<8x128xi32>
      %c1_i32 = arith.constant 1 : i32
      %96 = vector.broadcast %c1_i32 : i32 to vector<8x128xi32>
      %97 = arith.cmpi eq, %86, %96 : vector<8x128xi32>
      %98 = arith.andi %95, %97 : vector<8x128xi1>
      %cst_50 = arith.constant 0.000000e+00 : f32
      %99 = vector.broadcast %84 : f32 to vector<8x128xf32>
      %100 = vector.broadcast %cst_50 : f32 to vector<8x128xf32>
      %101 = arith.select %98, %99, %100 : vector<8x128xi1>, vector<8x128xf32>
      %102 = vector.broadcast %93 : f32 to vector<8x128xf32>
      %103 = arith.select %91, %102, %101 : vector<8x128xi1>, vector<8x128xf32>
      %c0_51 = arith.constant 0 : index
      %c0_52 = arith.constant 0 : index
      %104 = vector.load %arg10[%c0_51, %c0_52] : memref<8x128xf32, #tpu.memory_space<vmem>>, vector<8x128xf32>
      tpu.vector_store %arg10[%c0_51, %c0_52], %103 {strides = array<i32>} : memref<8x128xf32, #tpu.memory_space<vmem>>, vector<8x128xf32>,
    } else {
    }
    return
  }
  func.func @transform_0(%arg0: i32, %arg1: i32) -> (i32, i32) {
    %c0_i32 = arith.constant 0 : i32
    %c0_i32_0 = arith.constant 0 : i32
    return %arg0, %c0_i32 : i32, i32
  }
  func.func @transform_1(%arg0: i32, %arg1: i32) -> (i32, i32) {
    %c0_i32 = arith.constant 0 : i32
    %c0_i32_0 = arith.constant 0 : i32
    return %arg1, %c0_i32 : i32, i32
  }
  func.func @transform_2(%arg0: i32, %arg1: i32) -> (i32, i32) {
    %c0_i32 = arith.constant 0 : i32
    %c0_i32_0 = arith.constant 0 : i32
    %c0_i32_1 = arith.constant 0 : i32
    return %c0_i32, %c0_i32_0 : i32, i32
  }
  func.func @transform_3(%arg0: i32, %arg1: i32) -> (i32, i32) {
    %c0_i32 = arith.constant 0 : i32
    %c0_i32_0 = arith.constant 0 : i32
    %c0_i32_1 = arith.constant 0 : i32
    return %c0_i32, %c0_i32_0 : i32, i32
  }
  func.func @transform_4(%arg0: i32, %arg1: i32) -> (i32, i32) {
    %c0_i32 = arith.constant 0 : i32
    %c0_i32_0 = arith.constant 0 : i32
    %c0_i32_1 = arith.constant 0 : i32
    return %c0_i32, %c0_i32_0 : i32, i32
  }
  func.func @transform_5(%arg0: i32, %arg1: i32) -> (i32, i32) {
    %c0_i32 = arith.constant 0 : i32
    %c0_i32_0 = arith.constant 0 : i32
    %c0_i32_1 = arith.constant 0 : i32
    return %c0_i32, %c0_i32_0 : i32, i32
  }
  func.func @transform_6(%arg0: i32, %arg1: i32) -> (i32, i32) {
    %c0_i32 = arith.constant 0 : i32
    %c0_i32_0 = arith.constant 0 : i32
    %c0_i32_1 = arith.constant 0 : i32
    return %c0_i32, %c0_i32_0 : i32, i32
  }
  func.func @transform_7(%arg0: i32, %arg1: i32) -> (i32, i32) {
    %c0_i32 = arith.constant 0 : i32
    %c0_i32_0 = arith.constant 0 : i32
    %c0_i32_1 = arith.constant 0 : i32
    return %c0_i32, %c0_i32_0 : i32, i32
  }
  func.func @transform_8(%arg0: i32, %arg1: i32) -> (i32, i32) {
    %c0_i32 = arith.constant 0 : i32
    %c0_i32_0 = arith.constant 0 : i32
    return %arg0, %c0_i32 : i32, i32
  }
}

</mosaic_0001>

<llo_original>
// kernel: tpu_custom_call.1
$region0: #{tpu_custom_call.1}
  #allocation0 [shape = 'u32[]', space=smem, size = 0x4, offset = 0x4, fixed_abs, tag = 'smem constant byte address 0x4 - core index']
  #allocation1 [shape = 'u32[144,128]{1,0:T(1,128)}', space=vmem, size = 0x12000, scoped, tag = 'internal scratch']
  #allocation2 [shape = 'f32[8,1]{1,0:T(8,128)}', space=vmem, size = 0x1000, scoped, tag = 'scratch operand']
  #allocation3 [shape = 'f32[8,1]{1,0:T(8,128)}', space=vmem, size = 0x1000, scoped, tag = 'scratch operand']
  #allocation4 [shape = 'f32[1,1]{1,0:T(1,128)}', space=vmem, size = 0x200, scoped, tag = 'scratch operand']
  #allocation5 [shape = 'f32[1,1]{1,0:T(1,128)S(1)}', space=vmem, size = 0x200, scoped, tag = 'scoped memory for tpu_custom_call.1']
  %s0 = inlined_call_operand.hbm [shape: bf16[8,128], index: 0, kind: input, shape index: {}]
  %s1 = inlined_call_operand.hbm [shape: bf16[8,128], index: 1, kind: input, shape index: {}]
  %s2 = inlined_call_operand.hbm [shape: bf16[128,128], index: 2, kind: input, shape index: {}]
  %s3 = inlined_call_operand.vmem [shape: f32[1,128], index: 3, kind: input, shape index: {}]
  %s4 = inlined_call_operand.hbm [shape: bf16[128,128], index: 4, kind: input, shape index: {}]
  %s5 = inlined_call_operand.vmem [shape: f32[1,128], index: 5, kind: input, shape index: {}]
  %s6 = inlined_call_operand.vmem [shape: f32[1,128], index: 6, kind: input, shape index: {}]
  %s7 = inlined_call_operand.<no memory space> [shape: f32[1,1], index: 7, kind: input, shape index: {}]
  %s8 = inlined_call_operand.hbm [shape: f32[8,128], index: 8, kind: output, shape index: {}]
  %s9 = sld [smem:[#allocation0]]
  $region66: #{tpu_custom_call.1} parent=0
    _
  %s11 = ssub.s32 1, %s9
  %s12 = scalar_select 0, %s11, %s9
  %v13 = vstv %s7
  %14 = vst [vmem:[#allocation5] sm:$0x1] %v13
  $region1: #{tpu_custom_call.1} parent=0
    #allocation6 [shape = 'u8[2048]{0}', space=vmem, size = 0x800, scoped, tag = 'input window, operand 0, single buffered']
    #allocation7 [shape = 's32[1]{0}', space=sflag, size = 0x4, scoped, tag = 'scoped memory for tpu_custom_call.1']
    #allocation8 [shape = 's32[1]{0}', space=sflag, size = 0x4, scoped, tag = 'scoped memory for tpu_custom_call.1']
    #allocation9 [shape = 'u8[2048]{0}', space=vmem, size = 0x800, scoped, tag = 'input window, operand 1, single buffered']
    #allocation10 [shape = 's32[1]{0}', space=sflag, size = 0x4, scoped, tag = 'scoped memory for tpu_custom_call.1']
    #allocation11 [shape = 'u8[32768]{0}', space=vmem, size = 0x8000, scoped, tag = 'input window, operand 2, single buffered']
    #allocation12 [shape = 'u8[32768]{0}', space=vmem, size = 0x8000, scoped, tag = 'input window, operand 4, single buffered']
    #allocation13 [shape = 's32[1]{0}', space=sflag, size = 0x4, scoped, tag = 'scoped memory for tpu_custom_call.1']
    #allocation14 [shape = 'u8[4096]{0}', space=vmem, size = 0x1000, scoped, tag = 'output window, operand 0, single buffered']
    %15 = vsyncpa [#allocation7], 0
    %16 = vsyncpa [#allocation10], 0
    %17 = vsyncpa [#allocation13], 0
    %18 = vsyncpa [#allocation8], 0
    // Predicated region
    $region2: #{tpu_custom_call.1} parent=1 // pred_check
      _
    $region3: #{tpu_custom_call.1} parent=1 // pred_check_branch
      %20 = sbr.rel (0) target = $region5
    $region4: #{tpu_custom_call.1} parent=1 // pred_region
      %s22 = ssub.s32 64, 64
      %23 = vsyncadd [#allocation7], %s22
      %s25 = sshll.u32 [#allocation6], 4
      %s26 = int_to_ptr.vmem [resolvable:$true] %s25
      %28 = dma.hbm_to_vmem [thread:$0]  %s0, 64, %s26, [#allocation7]
    $region5: #{tpu_custom_call.1} parent=1 // pred_fallthru
      _
    // Predicated region
    $region6: #{tpu_custom_call.1} parent=1 // pred_check
      _
    $region7: #{tpu_custom_call.1} parent=1 // pred_check_branch
      %30 = sbr.rel (0) target = $region9
    $region8: #{tpu_custom_call.1} parent=1 // pred_region
      %s32 = ssub.s32 64, 64
      %33 = vsyncadd [#allocation10], %s32
      %s35 = sshll.u32 [#allocation9], 4
      %s36 = int_to_ptr.vmem [resolvable:$true] %s35
      %38 = dma.hbm_to_vmem [thread:$0]  %s1, 64, %s36, [#allocation10]
    $region9: #{tpu_custom_call.1} parent=1 // pred_fallthru
      _
    // Predicated region
    $region10: #{tpu_custom_call.1} parent=1 // pred_check
      _
    $region11: #{tpu_custom_call.1} parent=1 // pred_check_branch
      %40 = sbr.rel (0) target = $region13
    $region12: #{tpu_custom_call.1} parent=1 // pred_region
      %s42 = ssub.s32 1024, 1024
      %43 = vsyncadd [#allocation10], %s42
      %s44 = sshll.u32 [#allocation11], 4
      %s45 = int_to_ptr.vmem [resolvable:$true] %s44
      %50 = dma.hbm_to_vmem [thread:$0]  %s2, 1024, %s45, [#allocation10], 64, 64, 4
    $region13: #{tpu_custom_call.1} parent=1 // pred_fallthru
      _
    // Predicated region
    $region14: #{tpu_custom_call.1} parent=1 // pred_check
      _
    $region15: #{tpu_custom_call.1} parent=1 // pred_check_branch
      %52 = sbr.rel (0) target = $region17
    $region16: #{tpu_custom_call.1} parent=1 // pred_region
      _
    $region17: #{tpu_custom_call.1} parent=1 // pred_fallthru
      _
    // Predicated region
    $region18: #{tpu_custom_call.1} parent=1 // pred_check
      _
    $region19: #{tpu_custom_call.1} parent=1 // pred_check_branch
      %54 = sbr.rel (0) target = $region21
    $region20: #{tpu_custom_call.1} parent=1 // pred_region
      %s56 = ssub.s32 1024, 1024
      %57 = vsyncadd [#allocation13], %s56
      %s58 = sshll.u32 [#allocation12], 4
      %s59 = int_to_ptr.vmem [resolvable:$true] %s58
      %64 = dma.hbm_to_vmem [thread:$0]  %s4, 1024, %s59, [#allocation13], 64, 64, 4
    $region21: #{tpu_custom_call.1} parent=1 // pred_fallthru
      _
    // Predicated region
    $region22: #{tpu_custom_call.1} parent=1 // pred_check
      _
    $region23: #{tpu_custom_call.1} parent=1 // pred_check_branch
      %66 = sbr.rel (0) target = $region25
    $region24: #{tpu_custom_call.1} parent=1 // pred_region
      _
    $region25: #{tpu_custom_call.1} parent=1 // pred_fallthru
      _
    // Predicated region
    $region26: #{tpu_custom_call.1} parent=1 // pred_check
      _
    $region27: #{tpu_custom_call.1} parent=1 // pred_check_branch
      %68 = sbr.rel (0) target = $region29
    $region28: #{tpu_custom_call.1} parent=1 // pred_region
      _
    $region29: #{tpu_custom_call.1} parent=1 // pred_fallthru
      _
    // Predicated region
    $region30: #{tpu_custom_call.1} parent=1 // pred_check
      _
    $region31: #{tpu_custom_call.1} parent=1 // pred_check_branch
      %70 = sbr.rel (0) target = $region33
    $region32: #{tpu_custom_call.1} parent=1 // pred_region
      _
    $region33: #{tpu_custom_call.1} parent=1 // pred_fallthru
      _
    // Predicated region
    $region34: #{tpu_custom_call.1} parent=1 // pred_check
      _
    $region35: #{tpu_custom_call.1} parent=1 // pred_check_branch
      %72 = sbr.rel (0) target = $region37
    $region36: #{tpu_custom_call.1} parent=1 // pred_region
      %73 = dma.done [#allocation7], 64
    $region37: #{tpu_custom_call.1} parent=1 // pred_fallthru
      _
    // Predicated region
    $region38: #{tpu_custom_call.1} parent=1 // pred_check
      _
    $region39: #{tpu_custom_call.1} parent=1 // pred_check_branch
      %75 = sbr.rel (0) target = $region41
    $region40: #{tpu_custom_call.1} parent=1 // pred_region
      %76 = dma.done [#allocation10], 64
    $region41: #{tpu_custom_call.1} parent=1 // pred_fallthru
      _
    // Predicated region
    $region42: #{tpu_custom_call.1} parent=1 // pred_check
      _
    $region43: #{tpu_custom_call.1} parent=1 // pred_check_branch
      %78 = sbr.rel (0) target = $region45
    $region44: #{tpu_custom_call.1} parent=1 // pred_region
      %79 = dma.done [#allocation10], 1024
    $region45: #{tpu_custom_call.1} parent=1 // pred_fallthru
      _
    // Predicated region
    $region46: #{tpu_custom_call.1} parent=1 // pred_check
      _
    $region47: #{tpu_custom_call.1} parent=1 // pred_check_branch
      %81 = sbr.rel (0) target = $region49
    $region48: #{tpu_custom_call.1} parent=1 // pred_region
      %82 = dma.done [#allocation13], 1024
    $region49: #{tpu_custom_call.1} parent=1 // pred_fallthru
      _
    %p84 = scmp.eq.s32.totalorder 0, 0
    // Predicated region
    $region50: #{tpu_custom_call.1} parent=1 // pred_check
      %p85 = pneg %p84
    $region51: #{tpu_custom_call.1} parent=1 // pred_check_branch
      %87 = sbr.rel (%p85) target = $region53
    $region52: #{tpu_custom_call.1} parent=1 // pred_region
      %vm88 = vcmask 7168
      %89 = vst.msk [vmem:[#allocation2] sm:$0xff] %vm88, -inf
      %90 = vst.msk [vmem:[#allocation3] sm:$0xff] %vm88, 0.0
      %vm91 = vcmask 0
      %92 = vst.msk [vmem:[#allocation4] sm:$0x1] %vm91, 0.0
    $region53: #{tpu_custom_call.1} parent=1 // pred_fallthru
      _
    %v93 = vld [vmem:[#allocation6] sm:$0xf]
    %v96 = vunpack.c.l.s4 1966171168
    %v97 = vunpack.c.0.s8 %v96
    %v98 = vlaneseq
    %v99 = vshrl.u32 %v98, 7
    %v100 = vsub.s32 %v97, %v99
    %v101 = vrot.slane %v93, %v100
    %v102 = vcombine.high %v101, %v101
    %v104 = vunpack.c.l.s4 1966171168
    %v105 = vunpack.c.0.s8 %v104
    %v106 = vlaneseq
    %v107 = vshrl.u32 %v106, 7
    %v108 = vsub.s32 %v105, %v107
    %v109 = vrot.slane %v101, %v108
    %v111 = vunpack.c.l.s4 1966171168
    %v112 = vunpack.c.0.s8 %v111
    %v113 = vlaneseq
    %v114 = vshrl.u32 %v113, 7
    %v115 = vsub.s32 %v112, %v114
    %v116 = vrot.slane %v102, %v115
    %v117 = vcombine.high %v109, %v109
    %v118 = vcombine.high %v116, %v116
    %v119 = vunpack.i.l.s16 %v109
    %v120 = vunpack.i.h.s16 %v109
    %v121 = vunpack.i.l.s16 %v116
    %v122 = vunpack.i.h.s16 %v116
    %v123 = vunpack.i.l.s16 %v117
    %v124 = vunpack.i.h.s16 %v117
    %v125 = vunpack.i.l.s16 %v118
    %v126 = vunpack.i.h.s16 %v118
    %v127 = vld [vmem:[#allocation9] sm:$0xf]
    %v128 = vpack.i.b16 %v119, %v119
    %v129 = vpack.i.b16 %v120, %v120
    %v130 = vpack.i.b16 %v121, %v121
    %v131 = vpack.i.b16 %v122, %v122
    %v132 = vpack.i.b16 %v123, %v123
    %v133 = vpack.i.b16 %v124, %v124
    %v134 = vpack.i.b16 %v125, %v125
    %v135 = vpack.i.b16 %v126, %v126
    %v136 = vlaneseq
    %v137 = vshrl.u32 %v136, 7
    %v138 = vsub.s32 0, %v137
    %v139 = vrot.slane %v128, %v138
    %v140 = vlaneseq
    %v141 = vshrl.u32 %v140, 7
    %v142 = vsub.s32 0, %v141
    %v143 = vrot.slane %v129, %v142
    %v144 = vlaneseq
    %v145 = vshrl.u32 %v144, 7
    %v146 = vsub.s32 0, %v145
    %v147 = vrot.slane %v130, %v146
    %v148 = vlaneseq
    %v149 = vshrl.u32 %v148, 7
    %v150 = vsub.s32 0, %v149
    %v151 = vrot.slane %v131, %v150
    %v152 = vlaneseq
    %v153 = vshrl.u32 %v152, 7
    %v154 = vsub.s32 0, %v153
    %v155 = vrot.slane %v132, %v154
    %v156 = vlaneseq
    %v157 = vshrl.u32 %v156, 7
    %v158 = vsub.s32 0, %v157
    %v159 = vrot.slane %v133, %v158
    %v160 = vlaneseq
    %v161 = vshrl.u32 %v160, 7
    %v162 = vsub.s32 0, %v161
    %v163 = vrot.slane %v134, %v162
    %v164 = vlaneseq
    %v165 = vshrl.u32 %v164, 7
    %v166 = vsub.s32 0, %v165
    %v167 = vrot.slane %v135, %v166
    %v169 = vpack.i.b16 %v139, %v139
    %v171 = vlaneseq
    %v172 = vshrl.u32 %v171, 7
    %v173 = vsub.s32 0, %v172
    %v174 = vrot.slane %v169, %v173
    %v176 = vpack.i.b16 %v143, %v143
    %v178 = vlaneseq
    %v179 = vshrl.u32 %v178, 7
    %v180 = vsub.s32 0, %v179
    %v181 = vrot.slane %v176, %v180
    %v183 = vpack.i.b16 %v147, %v147
    %v185 = vlaneseq
    %v186 = vshrl.u32 %v185, 7
    %v187 = vsub.s32 0, %v186
    %v188 = vrot.slane %v183, %v187
    %v190 = vpack.i.b16 %v151, %v151
    %v192 = vlaneseq
    %v193 = vshrl.u32 %v192, 7
    %v194 = vsub.s32 0, %v193
    %v195 = vrot.slane %v190, %v194
    %v197 = vpack.i.b16 %v155, %v155
    %v199 = vlaneseq
    %v200 = vshrl.u32 %v199, 7
    %v201 = vsub.s32 0, %v200
    %v202 = vrot.slane %v197, %v201
    %v204 = vpack.i.b16 %v159, %v159
    %v206 = vlaneseq
    %v207 = vshrl.u32 %v206, 7
    %v208 = vsub.s32 0, %v207
    %v209 = vrot.slane %v204, %v208
    %v211 = vpack.i.b16 %v163, %v163
    %v213 = vlaneseq
    %v214 = vshrl.u32 %v213, 7
    %v215 = vsub.s32 0, %v214
    %v216 = vrot.slane %v211, %v215
    %v218 = vpack.i.b16 %v167, %v167
    %v220 = vlaneseq
    %v221 = vshrl.u32 %v220, 7
    %v222 = vsub.s32 0, %v221
    %v223 = vrot.slane %v218, %v222
    %v224 = vadd.bf16 %v174, %v127
    %v225 = vadd.bf16 %v181, %v127
    %v226 = vadd.bf16 %v188, %v127
    %v227 = vadd.bf16 %v195, %v127
    %v228 = vadd.bf16 %v202, %v127
    %v229 = vadd.bf16 %v209, %v127
    %v230 = vadd.bf16 %v216, %v127
    %v231 = vadd.bf16 %v223, %v127
    %v232 = vmax.bf16 %v224, 0
    %v233 = vmax.bf16 %v225, 0
    %v234 = vmax.bf16 %v226, 0
    %v235 = vmax.bf16 %v227, 0
    %v236 = vmax.bf16 %v228, 0
    %v237 = vmax.bf16 %v229, 0
    %v238 = vmax.bf16 %v230, 0
    %v239 = vmax.bf16 %v231, 0
    %v240 = vld [vmem:[#allocation11] sm:$0xf]
    %v241 = vld [vmem:[#allocation11 + $0x4] sm:$0xf]
    %v242 = vld [vmem:[#allocation11 + $0x8] sm:$0xf]
    %v243 = vld [vmem:[#allocation11 + $0xc] sm:$0xf]
    %v244 = vld [vmem:[#allocation11 + $0x10] sm:$0xf]
    %v245 = vld [vmem:[#allocation11 + $0x14] sm:$0xf]
    %v246 = vld [vmem:[#allocation11 + $0x18] sm:$0xf]
    %v247 = vld [vmem:[#allocation11 + $0x1c] sm:$0xf]
    %v248 = vld [vmem:[#allocation11 + $0x20] sm:$0xf]
    %v249 = vld [vmem:[#allocation11 + $0x24] sm:$0xf]
    %v250 = vld [vmem:[#allocation11 + $0x28] sm:$0xf]
    %v251 = vld [vmem:[#allocation11 + $0x2c] sm:$0xf]
    %v252 = vld [vmem:[#allocation11 + $0x30] sm:$0xf]
    %v253 = vld [vmem:[#allocation11 + $0x34] sm:$0xf]
    %v254 = vld [vmem:[#allocation11 + $0x38] sm:$0xf]
    %v255 = vld [vmem:[#allocation11 + $0x3c] sm:$0xf]
    %v256 = vld [vmem:[%s3] sm:$0x1]
    %v258 = vlaneseq
    %v259 = vshrl.u32 %v258, 7
    %v260 = vsub.s32 0, %v259
    %v261 = vrot.slane %v256, %v260
    %v271 = vunpack.c.l.b16 %v232
    %v272 = vunpack.c.l.b16 %v233
    %v273 = vunpack.c.l.b16 %v234
    %v274 = vunpack.c.l.b16 %v235
    %v275 = vunpack.c.l.b16 %v236
    %v276 = vunpack.c.l.b16 %v237
    %v277 = vunpack.c.l.b16 %v238
    %v278 = vunpack.c.l.b16 %v239
    %v279 = vpack.c.b16 %v272, %v271
    %v280 = vpack.c.b16 %v274, %v273
    %v281 = vpack.c.b16 %v276, %v275
    %v282 = vpack.c.b16 %v278, %v277
    %v303 = vunpack.c.l.b16 %v240
    %v304 = vunpack.c.l.b16 %v241
    %v305 = vunpack.c.l.b16 %v242
    %v306 = vunpack.c.l.b16 %v243
    %v307 = vunpack.c.l.b16 %v244
    %v308 = vunpack.c.l.b16 %v245
    %v309 = vunpack.c.l.b16 %v246
    %v310 = vunpack.c.l.b16 %v247
    %v311 = vunpack.c.l.b16 %v248
    %v312 = vunpack.c.l.b16 %v249
    %v313 = vunpack.c.l.b16 %v250
    %v314 = vunpack.c.l.b16 %v251
    %v315 = vunpack.c.l.b16 %v252
    %v316 = vunpack.c.l.b16 %v253
    %v317 = vunpack.c.l.b16 %v254
    %v318 = vunpack.c.l.b16 %v255
    %v319 = vpack.c.b16 %v304, %v303
    %v320 = vpack.c.b16 %v306, %v305
    %v321 = vpack.c.b16 %v308, %v307
    %v322 = vpack.c.b16 %v310, %v309
    %v323 = vpack.c.b16 %v312, %v311
    %v324 = vpack.c.b16 %v314, %v313
    %v325 = vpack.c.b16 %v316, %v315
    %v326 = vpack.c.b16 %v318, %v317
    %335 = vmatprep.subr.bf16.mxu0 0
    %336 = vmatpush1.bf16.msra.mxu0 %v326
    %337 = vmatprep.subr.bf16.mxu0 0
    %338 = vmatpush1.bf16.msra.mxu0 %v325
    %339 = vmatprep.subr.bf16.mxu0 0
    %340 = vmatpush1.bf16.msra.mxu0 %v324
    %341 = vmatprep.subr.bf16.mxu0 0
    %342 = vmatpush1.bf16.msra.mxu0 %v323
    %343 = vmatprep.subr.bf16.mxu0 0
    %344 = vmatpush1.bf16.msra.mxu0 %v322
    %345 = vmatprep.subr.bf16.mxu0 0
    %346 = vmatpush1.bf16.msra.mxu0 %v321
    %347 = vmatprep.subr.bf16.mxu0 0
    %348 = vmatpush1.bf16.msra.mxu0 %v320
    %349 = vmatprep.subr.bf16.mxu0 0
    %350 = vmatpush1.bf16.msra.mxu0 %v319
    %351 = vmatprep.subr.bf16.mxu0 0
    %352 = vmatpush2.bf16.msra.mxu0 0
    %353 = vmatprep.subr.bf16.mxu0 0
    %354 = vmatpush2.bf16.msra.mxu0 0
    %355 = vmatprep.subr.bf16.mxu0 0
    %356 = vmatpush2.bf16.msra.mxu0 0
    %357 = vmatprep.subr.bf16.mxu0 0
    %358 = vmatpush2.bf16.msra.mxu0 0
    %359 = vmatprep.subr.bf16.mxu0 0
    %360 = vmatpush2.bf16.msra.mxu0 0
    %361 = vmatprep.subr.bf16.mxu0 0
    %362 = vmatpush2.bf16.msra.mxu0 0
    %363 = vmatprep.subr.bf16.mxu0 0
    %364 = vmatpush2.bf16.msra.mxu0 0
    %365 = vmatprep.subr.bf16.mxu0 0
    %366 = vmatpush2.bf16.msra.mxu0 0
    %367 = vmatprep.mubr.bf16.mxu0 0
    %368 = vmatmul.mubr.bf16.gmra.mxu0 %v279
    %v369 = vpop.f32.mrf.mxu0
    %v370 = vadd.f32 %v261, %v369
    %v371 = vpop.f32.mrf.mxu0
    %v372 = vpop.f32.mrf.mxu0
    %v373 = vadd.f32 %v261, %v372
    %v374 = vpop.f32.mrf.mxu0
    %375 = vmatprep.mubr.bf16.mxu0 0
    %376 = vmatmul.mubr.bf16.gmra.mxu0 %v280
    %v377 = vpop.f32.mrf.mxu0
    %v378 = vadd.f32 %v261, %v377
    %v379 = vpop.f32.mrf.mxu0
    %v380 = vpop.f32.mrf.mxu0
    %v381 = vadd.f32 %v261, %v380
    %v382 = vpop.f32.mrf.mxu0
    %383 = vmatprep.mubr.bf16.mxu0 0
    %384 = vmatmul.mubr.bf16.gmra.mxu0 %v281
    %v385 = vpop.f32.mrf.mxu0
    %v386 = vadd.f32 %v261, %v385
    %v387 = vpop.f32.mrf.mxu0
    %v388 = vpop.f32.mrf.mxu0
    %v389 = vadd.f32 %v261, %v388
    %v390 = vpop.f32.mrf.mxu0
    %391 = vmatprep.mubr.bf16.mxu0 0
    %392 = vmatmul.mubr.bf16.gmra.mxu0 %v282
    %v393 = vpop.f32.mrf.mxu0
    %v394 = vadd.f32 %v261, %v393
    %v395 = vpop.f32.mrf.mxu0
    %v396 = vpop.f32.mrf.mxu0
    %v397 = vadd.f32 %v261, %v396
    %v398 = vpop.f32.mrf.mxu0
    %399 = vdwg.mxu0
    %v400 = vmax.f32 %v370, 0.0
    %v401 = vmax.f32 %v373, 0.0
    %v402 = vmax.f32 %v378, 0.0
    %v403 = vmax.f32 %v381, 0.0
    %v404 = vmax.f32 %v386, 0.0
    %v405 = vmax.f32 %v389, 0.0
    %v406 = vmax.f32 %v394, 0.0
    %v407 = vmax.f32 %v397, 0.0
    %v408 = vpack.c.bf16 %v401, %v400
    %v409 = vpack.c.bf16 %v403, %v402
    %v410 = vpack.c.bf16 %v405, %v404
    %v411 = vpack.c.bf16 %v407, %v406
    %v412 = vld [vmem:[#allocation12] sm:$0xf]
    %v413 = vld [vmem:[#allocation12 + $0x4] sm:$0xf]
    %v414 = vld [vmem:[#allocation12 + $0x8] sm:$0xf]
    %v415 = vld [vmem:[#allocation12 + $0xc] sm:$0xf]
    %v416 = vld [vmem:[#allocation12 + $0x10] sm:$0xf]
    %v417 = vld [vmem:[#allocation12 + $0x14] sm:$0xf]
    %v418 = vld [vmem:[#allocation12 + $0x18] sm:$0xf]
    %v419 = vld [vmem:[#allocation12 + $0x1c] sm:$0xf]
    %v420 = vld [vmem:[#allocation12 + $0x20] sm:$0xf]
    %v421 = vld [vmem:[#allocation12 + $0x24] sm:$0xf]
    %v422 = vld [vmem:[#allocation12 + $0x28] sm:$0xf]
    %v423 = vld [vmem:[#allocation12 + $0x2c] sm:$0xf]
    %v424 = vld [vmem:[#allocation12 + $0x30] sm:$0xf]
    %v425 = vld [vmem:[#allocation12 + $0x34] sm:$0xf]
    %v426 = vld [vmem:[#allocation12 + $0x38] sm:$0xf]
    %v427 = vld [vmem:[#allocation12 + $0x3c] sm:$0xf]
    %v428 = vld [vmem:[%s5] sm:$0x1]
    %v430 = vlaneseq
    %v431 = vshrl.u32 %v430, 7
    %v432 = vsub.s32 0, %v431
    %v433 = vrot.slane %v428, %v432
    %v451 = vunpack.c.l.b16 %v412
    %v452 = vunpack.c.l.b16 %v413
    %v453 = vunpack.c.l.b16 %v414
    %v454 = vunpack.c.l.b16 %v415
    %v455 = vunpack.c.l.b16 %v416
    %v456 = vunpack.c.l.b16 %v417
    %v457 = vunpack.c.l.b16 %v418
    %v458 = vunpack.c.l.b16 %v419
    %v459 = vunpack.c.l.b16 %v420
    %v460 = vunpack.c.l.b16 %v421
    %v461 = vunpack.c.l.b16 %v422
    %v462 = vunpack.c.l.b16 %v423
    %v463 = vunpack.c.l.b16 %v424
    %v464 = vunpack.c.l.b16 %v425
    %v465 = vunpack.c.l.b16 %v426
    %v466 = vunpack.c.l.b16 %v427
    %v467 = vpack.c.b16 %v452, %v451
    %v468 = vpack.c.b16 %v454, %v453
    %v469 = vpack.c.b16 %v456, %v455
    %v470 = vpack.c.b16 %v458, %v457
    %v471 = vpack.c.b16 %v460, %v459
    %v472 = vpack.c.b16 %v462, %v461
    %v473 = vpack.c.b16 %v464, %v463
    %v474 = vpack.c.b16 %v466, %v465
    %483 = vmatprep.subr.bf16.mxu0 0
    %484 = vmatpush1.bf16.msra.mxu0 %v474
    %485 = vmatprep.subr.bf16.mxu0 0
    %486 = vmatpush1.bf16.msra.mxu0 %v473
    %487 = vmatprep.subr.bf16.mxu0 0
    %488 = vmatpush1.bf16.msra.mxu0 %v472
    %489 = vmatprep.subr.bf16.mxu0 0
    %490 = vmatpush1.bf16.msra.mxu0 %v471
    %491 = vmatprep.subr.bf16.mxu0 0
    %492 = vmatpush1.bf16.msra.mxu0 %v470
    %493 = vmatprep.subr.bf16.mxu0 0
    %494 = vmatpush1.bf16.msra.mxu0 %v469
    %495 = vmatprep.subr.bf16.mxu0 0
    %496 = vmatpush1.bf16.msra.mxu0 %v468
    %497 = vmatprep.subr.bf16.mxu0 0
    %498 = vmatpush1.bf16.msra.mxu0 %v467
    %499 = vmatprep.subr.bf16.mxu0 0
    %500 = vmatpush2.bf16.msra.mxu0 0
    %501 = vmatprep.subr.bf16.mxu0 0
    %502 = vmatpush2.bf16.msra.mxu0 0
    %503 = vmatprep.subr.bf16.mxu0 0
    %504 = vmatpush2.bf16.msra.mxu0 0
    %505 = vmatprep.subr.bf16.mxu0 0
    %506 = vmatpush2.bf16.msra.mxu0 0
    %507 = vmatprep.subr.bf16.mxu0 0
    %508 = vmatpush2.bf16.msra.mxu0 0
    %509 = vmatprep.subr.bf16.mxu0 0
    %510 = vmatpush2.bf16.msra.mxu0 0
    %511 = vmatprep.subr.bf16.mxu0 0
    %512 = vmatpush2.bf16.msra.mxu0 0
    %513 = vmatprep.subr.bf16.mxu0 0
    %514 = vmatpush2.bf16.msra.mxu0 0
    %515 = vmatprep.mubr.bf16.mxu0 0
    %516 = vmatmul.mubr.bf16.gmra.mxu0 %v408
    %v517 = vpop.f32.mrf.mxu0
    %v518 = vadd.f32 %v433, %v517
    %v519 = vpop.f32.mrf.mxu0
    %v520 = vpop.f32.mrf.mxu0
    %v521 = vadd.f32 %v433, %v520
    %v522 = vpop.f32.mrf.mxu0
    %523 = vmatprep.mubr.bf16.mxu0 0
    %524 = vmatmul.mubr.bf16.gmra.mxu0 %v409
    %v525 = vpop.f32.mrf.mxu0
    %v526 = vadd.f32 %v433, %v525
    %v527 = vpop.f32.mrf.mxu0
    %v528 = vpop.f32.mrf.mxu0
    %v529 = vadd.f32 %v433, %v528
    %v530 = vpop.f32.mrf.mxu0
    %531 = vmatprep.mubr.bf16.mxu0 0
    %532 = vmatmul.mubr.bf16.gmra.mxu0 %v410
    %v533 = vpop.f32.mrf.mxu0
    %v534 = vadd.f32 %v433, %v533
    %v535 = vpop.f32.mrf.mxu0
    %v536 = vpop.f32.mrf.mxu0
    %v537 = vadd.f32 %v433, %v536
    %v538 = vpop.f32.mrf.mxu0
    %539 = vmatprep.mubr.bf16.mxu0 0
    %540 = vmatmul.mubr.bf16.gmra.mxu0 %v411
    %v541 = vpop.f32.mrf.mxu0
    %v542 = vadd.f32 %v433, %v541
    %v543 = vpop.f32.mrf.mxu0
    %v544 = vpop.f32.mrf.mxu0
    %v545 = vadd.f32 %v433, %v544
    %v546 = vpop.f32.mrf.mxu0
    %547 = vdwg.mxu0
    %v548 = vmax.f32 %v518, 0.0
    %v549 = vmax.f32 %v521, 0.0
    %v550 = vmax.f32 %v526, 0.0
    %v551 = vmax.f32 %v529, 0.0
    %v552 = vmax.f32 %v534, 0.0
    %v553 = vmax.f32 %v537, 0.0
    %v554 = vmax.f32 %v542, 0.0
    %v555 = vmax.f32 %v545, 0.0
    %v556 = vpack.c.bf16 %v549, %v548
    %v557 = vpack.c.bf16 %v551, %v550
    %v558 = vpack.c.bf16 %v553, %v552
    %v559 = vpack.c.bf16 %v555, %v554
    %v560 = vld [vmem:[%s6] sm:$0x1]
    %v561 = vunpack.c.l.bf16 %v556
    %v562 = vunpack.c.h.bf16 %v556
    %v563 = vunpack.c.l.bf16 %v557
    %v564 = vunpack.c.h.bf16 %v557
    %v565 = vunpack.c.l.bf16 %v558
    %v566 = vunpack.c.h.bf16 %v558
    %v567 = vunpack.c.l.bf16 %v559
    %v568 = vunpack.c.h.bf16 %v559
    %v570 = vlaneseq
    %v571 = vshrl.u32 %v570, 7
    %v572 = vsub.s32 0, %v571
    %v573 = vrot.slane %v560, %v572
    %v575 = vmul.f32 %v561, %v573
    %v576 = vmul.f32 %v562, %v573
    %v577 = vmul.f32 %v563, %v573
    %v578 = vmul.f32 %v564, %v573
    %v579 = vmul.f32 %v565, %v573
    %v580 = vmul.f32 %v566, %v573
    %v581 = vmul.f32 %v567, %v573
    %v582 = vmul.f32 %v568, %v573
    %583 = vadd.xlane.f32.xlu0 %v575
    %v584 = vpop.xlane.xlu0 %583
    %585 = vadd.xlane.f32.xlu0 %v576
    %v586 = vpop.xlane.xlu0 %585
    %587 = vadd.xlane.f32.xlu0 %v577
    %v588 = vpop.xlane.xlu0 %587
    %589 = vadd.xlane.f32.xlu0 %v578
    %v590 = vpop.xlane.xlu0 %589
    %591 = vadd.xlane.f32.xlu0 %v579
    %v592 = vpop.xlane.xlu0 %591
    %593 = vadd.xlane.f32.xlu0 %v580
    %v594 = vpop.xlane.xlu0 %593
    %595 = vadd.xlane.f32.xlu0 %v581
    %v596 = vpop.xlane.xlu0 %595
    %597 = vadd.xlane.f32.xlu0 %v582
    %v598 = vpop.xlane.xlu0 %597
    %v599 = vld [vmem:[#allocation5] sm:$0x1]
    %v601 = vlaneseq
    %v602 = vshrl.u32 %v601, 7
    %v603 = vsub.s32 0, %v602
    %v604 = vrot.slane %v599, %v603
    %605 = vset.pattern.permute.xlu0 0
    %606 = vperm.xlu0 %605, %v604
    %v607 = vpop.permute.xlu0 %606
    %v609 = vadd.f32 %v584, %v607
    %v610 = vadd.f32 %v586, %v607
    %v611 = vadd.f32 %v588, %v607
    %v612 = vadd.f32 %v590, %v607
    %v613 = vadd.f32 %v592, %v607
    %v614 = vadd.f32 %v594, %v607
    %v615 = vadd.f32 %v596, %v607
    %v616 = vadd.f32 %v598, %v607
    %s617 = smul.u32 0, 8
    %v618 = vlaneseq
    %v619 = vshrl.u32 %v618, 7
    %v620 = vstv %s617
    %v621 = vadd.s32 %v620, %v619
    %s622 = smul.u32 0, 8
    %v623 = vlaneseq
    %v624 = vand.u32 %v623, 127
    %v625 = vstv %s622
    %v626 = vadd.s32 %v625, %v624
    %v627 = vld [vmem:[#allocation4] sm:$0x1]
    %vm628 = vcmp.eq.s32.totalorder %v621, %v626
    %v637 = vlaneseq
    %v638 = vshrl.u32 %v637, 7
    %v639 = vsub.s32 %v624, %v638
    %v640 = vrot.slane %v609, %v639
    %v641 = vlaneseq
    %v642 = vshrl.u32 %v641, 7
    %v643 = vsub.s32 %v624, %v642
    %v644 = vrot.slane %v610, %v643
    %v645 = vlaneseq
    %v646 = vshrl.u32 %v645, 7
    %v647 = vsub.s32 %v624, %v646
    %v648 = vrot.slane %v611, %v647
    %v649 = vlaneseq
    %v650 = vshrl.u32 %v649, 7
    %v651 = vsub.s32 %v624, %v650
    %v652 = vrot.slane %v612, %v651
    %v653 = vlaneseq
    %v654 = vshrl.u32 %v653, 7
    %v655 = vsub.s32 %v624, %v654
    %v656 = vrot.slane %v613, %v655
    %v657 = vlaneseq
    %v658 = vshrl.u32 %v657, 7
    %v659 = vsub.s32 %v624, %v658
    %v660 = vrot.slane %v614, %v659
    %v661 = vlaneseq
    %v662 = vshrl.u32 %v661, 7
    %v663 = vsub.s32 %v624, %v662
    %v664 = vrot.slane %v615, %v663
    %v665 = vlaneseq
    %v666 = vshrl.u32 %v665, 7
    %v667 = vsub.s32 %v624, %v666
    %v668 = vrot.slane %v616, %v667
    %vm669 = vcmask 1041409
    %v670 = vsel %vm669, %v644, %v640
    %vm671 = vcmask 1042434
    %v672 = vsel %vm671, %v648, %v670
    %vm673 = vcmask 1043459
    %v674 = vsel %vm673, %v652, %v672
    %vm675 = vcmask 1044484
    %v676 = vsel %vm675, %v656, %v674
    %vm677 = vcmask 1045509
    %v678 = vsel %vm677, %v660, %v676
    %vm679 = vcmask 1046534
    %v680 = vsel %vm679, %v664, %v678
    %vm681 = vcmask 1047559
    %v682 = vsel %vm681, %v668, %v680
    %v684 = vsel %vm628, %v682, 0.0
    %vm685 = vcmask 64512
    %v686 = vsel %vm685, %v684, 0.0
    %687 = vadd.xlane.f32.xlu0 %v686
    %v688 = vpop.xlane.xlu0 %687
    %v689 = vrot.slane %v688, 4
    %v690 = vadd.f32 %v688, %v689
    %v691 = vrot.slane %v690, 2
    %v692 = vadd.f32 %v690, %v691
    %v693 = vrot.slane %v692, 1
    %v694 = vadd.f32 %v692, %v693
    %s695 = vtos %v694
    %v696 = vstv %s695
    %v697 = vadd.f32 %v627, %v696
    %vm698 = vcmask 0
    %699 = vst.msk [vmem:[#allocation4] sm:$0x1] %vm698, %v697
    %v700 = vld [vmem:[#allocation2] sm:$0xff]
    %v701 = vsel %vm685, %v682, -inf
    %702 = vmax.xlane.f32.xlu0 %v701
    %v703 = vpop.xlane.xlu0 %702
    %v704 = vmax.f32 %v700, %v703
    %v705 = vsub.f32 %v700, %v704
    %v706 = vmul.f32 %v705, 1.442695
    %v707 = vpow.pop %v706
    %v708 = vld [vmem:[#allocation3] sm:$0xff]
    %v709 = vmul.f32 %v707, %v708
    %711 = vset.pattern.permute.xlu0 0
    %712 = vperm.xlu0 %711, %v704
    %v713 = vpop.permute.xlu0 %712
    %v714 = vlaneseq
    %v715 = vshrl.u32 %v714, 7
    %v716 = vsub.s32 0, %v715
    %v717 = vrot.slane %v713, %v716
    %v718 = vlaneseq
    %v719 = vshrl.u32 %v718, 7
    %v720 = vsub.s32 1, %v719
    %v721 = vrot.slane %v713, %v720
    %v722 = vlaneseq
    %v723 = vshrl.u32 %v722, 7
    %v724 = vsub.s32 2, %v723
    %v725 = vrot.slane %v713, %v724
    %v726 = vlaneseq
    %v727 = vshrl.u32 %v726, 7
    %v728 = vsub.s32 3, %v727
    %v729 = vrot.slane %v713, %v728
    %v730 = vlaneseq
    %v731 = vshrl.u32 %v730, 7
    %v732 = vsub.s32 4, %v731
    %v733 = vrot.slane %v713, %v732
    %v734 = vlaneseq
    %v735 = vshrl.u32 %v734, 7
    %v736 = vsub.s32 5, %v735
    %v737 = vrot.slane %v713, %v736
    %v738 = vlaneseq
    %v739 = vshrl.u32 %v738, 7
    %v740 = vsub.s32 6, %v739
    %v741 = vrot.slane %v713, %v740
    %v742 = vlaneseq
    %v743 = vshrl.u32 %v742, 7
    %v744 = vsub.s32 7, %v743
    %v745 = vrot.slane %v713, %v744
    %v754 = vsub.f32 %v609, %v717
    %v755 = vsub.f32 %v610, %v721
    %v756 = vsub.f32 %v611, %v725
    %v757 = vsub.f32 %v612, %v729
    %v758 = vsub.f32 %v613, %v733
    %v759 = vsub.f32 %v614, %v737
    %v760 = vsub.f32 %v615, %v741
    %v761 = vsub.f32 %v616, %v745
    %v762 = vmul.f32 %v754, 1.442695
    %v763 = vpow.pop %v762
    %v764 = vmul.f32 %v755, 1.442695
    %v765 = vpow.pop %v764
    %v766 = vmul.f32 %v756, 1.442695
    %v767 = vpow.pop %v766
    %v768 = vmul.f32 %v757, 1.442695
    %v769 = vpow.pop %v768
    %v770 = vmul.f32 %v758, 1.442695
    %v771 = vpow.pop %v770
    %v772 = vmul.f32 %v759, 1.442695
    %v773 = vpow.pop %v772
    %v774 = vmul.f32 %v760, 1.442695
    %v775 = vpow.pop %v774
    %v776 = vmul.f32 %v761, 1.442695
    %v777 = vpow.pop %v776
    %786 = vset.pattern.permute.xlu0 0
    %787 = vperm.xlu0 %786, %v763
    %v788 = vpop.permute.xlu0 %787
    %789 = vset.pattern.permute.xlu0 0
    %790 = vperm.xlu0 %789, %v765
    %v791 = vpop.permute.xlu0 %790
    %792 = vset.pattern.permute.xlu0 0
    %793 = vperm.xlu0 %792, %v767
    %v794 = vpop.permute.xlu0 %793
    %795 = vset.pattern.permute.xlu0 0
    %796 = vperm.xlu0 %795, %v769
    %v797 = vpop.permute.xlu0 %796
    %798 = vset.pattern.permute.xlu0 0
    %799 = vperm.xlu0 %798, %v771
    %v800 = vpop.permute.xlu0 %799
    %801 = vset.pattern.permute.xlu0 0
    %802 = vperm.xlu0 %801, %v773
    %v803 = vpop.permute.xlu0 %802
    %804 = vset.pattern.permute.xlu0 0
    %805 = vperm.xlu0 %804, %v775
    %v806 = vpop.permute.xlu0 %805
    %807 = vset.pattern.permute.xlu0 0
    %808 = vperm.xlu0 %807, %v777
    %v809 = vpop.permute.xlu0 %808
    %v810 = vlaneseq
    %v811 = vshrl.u32 %v810, 7
    %v812 = vsub.s32 %v624, %v811
    %v813 = vrot.slane %v788, %v812
    %v814 = vlaneseq
    %v815 = vshrl.u32 %v814, 7
    %v816 = vsub.s32 %v624, %v815
    %v817 = vrot.slane %v791, %v816
    %v818 = vlaneseq
    %v819 = vshrl.u32 %v818, 7
    %v820 = vsub.s32 %v624, %v819
    %v821 = vrot.slane %v794, %v820
    %v822 = vlaneseq
    %v823 = vshrl.u32 %v822, 7
    %v824 = vsub.s32 %v624, %v823
    %v825 = vrot.slane %v797, %v824
    %v826 = vlaneseq
    %v827 = vshrl.u32 %v826, 7
    %v828 = vsub.s32 %v624, %v827
    %v829 = vrot.slane %v800, %v828
    %v830 = vlaneseq
    %v831 = vshrl.u32 %v830, 7
    %v832 = vsub.s32 %v624, %v831
    %v833 = vrot.slane %v803, %v832
    %v834 = vlaneseq
    %v835 = vshrl.u32 %v834, 7
    %v836 = vsub.s32 %v624, %v835
    %v837 = vrot.slane %v806, %v836
    %v838 = vlaneseq
    %v839 = vshrl.u32 %v838, 7
    %v840 = vsub.s32 %v624, %v839
    %v841 = vrot.slane %v809, %v840
    %v842 = vsel %vm669, %v817, %v813
    %v843 = vsel %vm671, %v821, %v842
    %v844 = vsel %vm673, %v825, %v843
    %v845 = vsel %vm675, %v829, %v844
    %v846 = vsel %vm677, %v833, %v845
    %v847 = vsel %vm679, %v837, %v846
    %v848 = vsel %vm681, %v841, %v847
    %v850 = vsel %vm685, %v848, 0.0
    %851 = vadd.xlane.f32.xlu0 %v850
    %v852 = vpop.xlane.xlu0 %851
    %v853 = vadd.f32 %v709, %v852
    %vm854 = vcmask 7168
    %855 = vst.msk [vmem:[#allocation3] sm:$0xff] %vm854, %v853
    %856 = vst.msk [vmem:[#allocation2] sm:$0xff] %vm854, %v704
    // Predicated region
    $region54: #{tpu_custom_call.1} parent=1 // pred_check
      %p857 = pneg %p84
    $region55: #{tpu_custom_call.1} parent=1 // pred_check_branch
      %859 = sbr.rel (%p857) target = $region57
    $region56: #{tpu_custom_call.1} parent=1 // pred_region
      %v860 = vld [vmem:[#allocation2] sm:$0xff]
      %v861 = vld [vmem:[#allocation3] sm:$0xff]
      %v862 = vlog2.pop %v861
      %v863 = vmul.f32 %v862, 0.6931472
      %v864 = vadd.f32 %v860, %v863
      %v865 = vsel %vm854, %v864, 0.0
      %866 = vadd.xlane.f32.xlu0 %v865
      %v867 = vpop.xlane.xlu0 %866
      %v868 = vrot.slane %v867, 4
      %v869 = vadd.f32 %v867, %v868
      %v870 = vrot.slane %v869, 2
      %v871 = vadd.f32 %v869, %v870
      %v872 = vrot.slane %v871, 1
      %v873 = vadd.f32 %v871, %v872
      %s874 = vtos %v873
      %vm875 = vcmp.eq.s32.totalorder %v619, 0
      %vm876 = vcmp.eq.s32.totalorder %v624, 0
      %vm877 = vmand %vm875, %vm876
      %v878 = vld [vmem:[#allocation4] sm:$0x1]
      %s879 = vtos %v878
      %vm880 = vcmp.eq.s32.totalorder %v624, 1
      %vm881 = vmand %vm875, %vm880
      %v882 = vstv %s874
      %v883 = vsel %vm881, %v882, 0.0
      %v884 = vstv %s879
      %v885 = vsel %vm877, %v884, %v883
      %886 = vst [vmem:[#allocation14] sm:$0xff] %v885
    $region57: #{tpu_custom_call.1} parent=1 // pred_fallthru
      _
    // Predicated region
    $region58: #{tpu_custom_call.1} parent=1 // pred_check
      _
    $region59: #{tpu_custom_call.1} parent=1 // pred_check_branch
      %888 = sbr.rel (0) target = $region61
    $region60: #{tpu_custom_call.1} parent=1 // pred_region
      %s890 = ssub.s32 128, 128
      %891 = vsyncadd [#allocation8], %s890
      %s893 = sshll.u32 [#allocation14], 4
      %s894 = int_to_ptr.vmem [resolvable:$true] %s893
      %896 = dma.vmem_to_hbm [thread:$0]  %s894, 128, %s8, [#allocation8]
    $region61: #{tpu_custom_call.1} parent=1 // pred_fallthru
      _
    // Predicated region
    $region62: #{tpu_custom_call.1} parent=1 // pred_check
      _
    $region63: #{tpu_custom_call.1} parent=1 // pred_check_branch
      %898 = sbr.rel (0) target = $region65
    $region64: #{tpu_custom_call.1} parent=1 // pred_region
      %899 = dma.done [#allocation8], 128
    $region65: #{tpu_custom_call.1} parent=1 // pred_fallthru
      _
    %900 = vsyncpa [#allocation7], 1
    %901 = vsyncpa [#allocation10], 1
    %902 = vsyncpa [#allocation13], 1
    %903 = vsyncpa [#allocation8], 1

</llo_original>
